<compile_context>
chip_gen: v5e
topology: v5e:2x2
jax: 0.10.0
libtpu: 0.0.40
codegen_flags: <defaults>
</compile_context>

<pallas_src>
import functools

import jax
import jax.numpy as jnp
from jax.experimental import pallas as pl
from jax.experimental.pallas import tpu as pltpu

# ---------------------------------------------------------------------------
# Model hyper-parameters (globals of the original file).
# ---------------------------------------------------------------------------
GRAPH_HIDDEN = 32
REDUCED_DIMENSION_SIZE = 16
LOGIT_HIDDEN = 32
NUMTOOLS = 16
IN_DIM = GRAPH_HIDDEN + REDUCED_DIMENSION_SIZE            # 48

# Packed-parameter slab layout ([P_ROWS, P_COLS] f32, sections 8-row aligned):
#   rows [0, 48)   : W1  (IN_DIM x LOGIT_HIDDEN)
#   row  48        : b1  (LOGIT_HIDDEN)
#   rows [56, 88)  : W2  (LOGIT_HIDDEN x NUMTOOLS), lanes >= NUMTOOLS zero
#   row  88        : b2  (NUMTOOLS),                lanes >= NUMTOOLS zero
P_COLS = LOGIT_HIDDEN                                     # 32
W2_ROW = ((IN_DIM + 1 + 7) // 8) * 8                      # 56
P_ROWS = ((W2_ROW + LOGIT_HIDDEN + 1 + 7) // 8) * 8       # 96


def _round_up(n, m):
    return ((n + m - 1) // m) * m


# ---------------------------------------------------------------------------
# Kernel: one batch tile per grid step, params resident across all steps.
# ---------------------------------------------------------------------------
def _decoder_kernel(x_ref, p_ref, out_ref):
    x = x_ref[...]                                                    # [bt, 48] f32

    w1 = p_ref[0:IN_DIM, :]                                           # [48, 32]
    b1 = p_ref[IN_DIM:IN_DIM + 1, :]                                  # [1, 32]
    w2 = p_ref[W2_ROW:W2_ROW + LOGIT_HIDDEN, :]                       # [32, 32] (lane-padded)
    b2 = p_ref[W2_ROW + LOGIT_HIDDEN:W2_ROW + LOGIT_HIDDEN + 1, :]    # [1, 32]

    hid = jnp.tanh(
        jnp.dot(x, w1, preferred_element_type=jnp.float32) + b1)          # [bt, 32]
    logits = jnp.dot(hid, w2, preferred_element_type=jnp.float32) + b2    # [bt, 32]
    # Padded lanes (>= NUMTOOLS) of w2/b2 are zero; slice them away on store.
    out_ref[...] = jax.nn.sigmoid(logits)[:, :NUMTOOLS]                   # [bt, 16]


# ---------------------------------------------------------------------------
# Wrapper: batch-tiled grid, params DMA'd once, batch axis "parallel".
# ---------------------------------------------------------------------------
@functools.partial(jax.jit, static_argnames=("block_b",))
def decoder_new(x, p_packed, *, block_b=1024):
    """x: [B, GRAPH_HIDDEN + REDUCED_DIMENSION_SIZE] f32 -> [B, NUMTOOLS] f32."""
    B = x.shape[0]
    bt = min(block_b, _round_up(max(B, 1), 8))        # 8-row sublane alignment
    b_pad = _round_up(B, bt)
    if b_pad != B:
        x = jnp.pad(x, ((0, b_pad - B), (0, 0)))
    grid = (b_pad // bt,)

    out = pl.pallas_call(
        _decoder_kernel,
        out_shape=jax.ShapeDtypeStruct((b_pad, NUMTOOLS), jnp.float32),
        grid=grid,
        in_specs=[
            pl.BlockSpec((bt, IN_DIM), lambda i: (i, 0)),
            # Constant block index -> weights fetched once, VMEM-resident.
            pl.BlockSpec((P_ROWS, P_COLS), lambda i: (0, 0)),
        ],
        out_specs=pl.BlockSpec((bt, NUMTOOLS), lambda i: (i, 0)),
        compiler_params=pltpu.CompilerParams(
            dimension_semantics=("parallel",)),
    )(x, p_packed)

    return out[:B] if b_pad != B else out


# ---------------------------------------------------------------------------
# Parameter packing: Linear weights stored PRE-TRANSPOSED as [in, out]; both
# layers packed into a single slab to minimise DMA count.
# ---------------------------------------------------------------------------
def pack_params(w1, b1, w2, b2):
    p = jnp.zeros((P_ROWS, P_COLS), jnp.float32)
    p = p.at[0:IN_DIM, :].set(w1)                                    # W1
    p = p.at[IN_DIM, :].set(b1)                                      # b1
    p = p.at[W2_ROW:W2_ROW + LOGIT_HIDDEN, :NUMTOOLS].set(w2)        # W2
    p = p.at[W2_ROW + LOGIT_HIDDEN, :NUMTOOLS].set(b2)               # b2
    return p


def reference(x, w1, b1, w2, b2):
    hid = jnp.tanh(x @ w1 + b1)
    return jax.nn.sigmoid(hid @ w2 + b2)


if __name__ == "__main__":
    key = jax.random.PRNGKey(0)
    k_par, k_x = jax.random.split(key)
    k1, k2, k3, k4 = jax.random.split(k_par, 4)

    w1 = 0.2 * jax.random.normal(k1, (IN_DIM, LOGIT_HIDDEN), jnp.float32)
    b1 = 0.2 * jax.random.normal(k2, (LOGIT_HIDDEN,), jnp.float32)
    w2 = 0.2 * jax.random.normal(k3, (LOGIT_HIDDEN, NUMTOOLS), jnp.float32)
    b2 = 0.2 * jax.random.normal(k4, (NUMTOOLS,), jnp.float32)
    p_packed = pack_params(w1, b1, w2, b2)

    B = 64
    x = jax.random.normal(k_x, (B, IN_DIM), jnp.float32)

    # Small tile (16 rows) so this demo exercises a multi-step grid with the
    # parameter slab resident across steps; production default is 1024.
    out = jax.block_until_ready(decoder_new(x, p_packed, block_b=16))
    ref = reference(x, w1, b1, w2, b2)

    assert out.shape == (B, NUMTOOLS), out.shape
    assert bool(jnp.all(jnp.isfinite(out))), "non-finite output"
    max_err = float(jnp.max(jnp.abs(out - ref)))
    # Loose enough to tolerate MXU f32 pass-count differences vs the XLA ref.
    assert max_err < 1e-2, f"max abs diff {max_err}"

    print("KERNEL_OK")
</pallas_src>

<mosaic_0001>
module attributes {stable_mosaic.version = 11 : i64} {
  func.func @_decoder_kernel(%arg0: i32, %arg1: memref<16x48xf32, #tpu.memory_space<vmem>>, %arg2: memref<96x32xf32, #tpu.memory_space<vmem>>, %arg3: memref<16x16xf32, #tpu.memory_space<vmem>>) attributes {dimension_semantics = [#tpu.dimension_semantics<parallel>], iteration_bounds = array<i64: 4>, scalar_prefetch = 0 : i64, scratch_operands = 0 : i64, tpu.core_type = #tpu.core_type<tc>, window_params = [{transform_indices = @transform_0, window_bounds = array<i64: 16, 48>}, {pipeline_mode = #tpu.pipeline_mode<synchronous>, transform_indices = @transform_1, window_bounds = array<i64: 96, 32>}, {transform_indices = @transform_2, window_bounds = array<i64: 16, 16>}]} {
    %c0 = arith.constant 0 : index
    %c0_0 = arith.constant 0 : index
    %0 = vector.load %arg1[%c0, %c0_0] : memref<16x48xf32, #tpu.memory_space<vmem>>, vector<16x48xf32>
    %c0_1 = arith.constant 0 : index
    %c0_2 = arith.constant 0 : index
    %1 = vector.load %arg2[%c0_1, %c0_2] : memref<96x32xf32, #tpu.memory_space<vmem>>, vector<48x32xf32>
    %c48 = arith.constant 48 : index
    %c0_3 = arith.constant 0 : index
    %2 = vector.load %arg2[%c48, %c0_3] : memref<96x32xf32, #tpu.memory_space<vmem>>, vector<1x32xf32>
    %c56 = arith.constant 56 : index
    %c0_4 = arith.constant 0 : index
    %3 = vector.load %arg2[%c56, %c0_4] : memref<96x32xf32, #tpu.memory_space<vmem>>, vector<32x32xf32>
    %c88 = arith.constant 88 : index
    %c0_5 = arith.constant 0 : index
    %4 = vector.load %arg2[%c88, %c0_5] : memref<96x32xf32, #tpu.memory_space<vmem>>, vector<1x32xf32>
    %cst = arith.constant dense<0.000000e+00> : vector<16x32xf32>
    %5 = tpu.matmul %0, %1, %cst {dimension_numbers = #tpu.dot_dimension_numbers<[1], [0], [0], [1], [0, 0, 1, 1], [], []>} : vector<16x48xf32>, vector<48x32xf32>, vector<16x32xf32> -> vector<16x32xf32>
    %6 = vector.broadcast %2 : vector<1x32xf32> to vector<16x32xf32>
    %7 = arith.addf %5, %6 : vector<16x32xf32>
    %8 = math.tanh %7 : vector<16x32xf32>
    %cst_6 = arith.constant dense<0.000000e+00> : vector<16x32xf32>
    %9 = tpu.matmul %8, %3, %cst_6 {dimension_numbers = #tpu.dot_dimension_numbers<[1], [0], [0], [1], [0, 0, 1, 1], [], []>} : vector<16x32xf32>, vector<32x32xf32>, vector<16x32xf32> -> vector<16x32xf32>
    %10 = vector.broadcast %4 : vector<1x32xf32> to vector<16x32xf32>
    %11 = arith.addf %9, %10 : vector<16x32xf32>
    %12 = arith.negf %11 : vector<16x32xf32>
    %13 = math.exp %12 : vector<16x32xf32>
    %cst_7 = arith.constant 1.000000e+00 : f32
    %14 = vector.broadcast %cst_7 : f32 to vector<16x32xf32>
    %15 = arith.addf %14, %13 : vector<16x32xf32>
    %16 = arith.divf %14, %15 : vector<16x32xf32>
    %17 = vector.extract_strided_slice %16 {offsets = [0, 0], sizes = [16, 16], strides = [1, 1]} : vector<16x32xf32> to vector<16x16xf32>
    %c0_8 = arith.constant 0 : index
    %c0_9 = arith.constant 0 : index
    %18 = vector.load %arg3[%c0_8, %c0_9] : memref<16x16xf32, #tpu.memory_space<vmem>>, vector<16x16xf32>
    tpu.vector_store %arg3[%c0_8, %c0_9], %17 {strides = array<i32>} : memref<16x16xf32, #tpu.memory_space<vmem>>, vector<16x16xf32>,
    return
  }
  func.func @transform_0(%arg0: i32) -> (i32, i32) {
    %c0_i32 = arith.constant 0 : i32
    %c0_i32_0 = arith.constant 0 : i32
    return %arg0, %c0_i32 : i32, i32
  }
  func.func @transform_1(%arg0: i32) -> (i32, i32) {
    %c0_i32 = arith.constant 0 : i32
    %c0_i32_0 = arith.constant 0 : i32
    %c0_i32_1 = arith.constant 0 : i32
    return %c0_i32, %c0_i32_0 : i32, i32
  }
  func.func @transform_2(%arg0: i32) -> (i32, i32) {
    %c0_i32 = arith.constant 0 : i32
    %c0_i32_0 = arith.constant 0 : i32
    return %arg0, %c0_i32 : i32, i32
  }
}

</mosaic_0001>

<llo_original>
// kernel: decoder_new.1
$region0: #{decoder_new.1}
  #allocation0 [shape = 'u32[]', space=smem, size = 0x4, offset = 0x4, fixed_abs, tag = 'smem constant byte address 0x4 - core index']
  #allocation1 [shape = 'u32[72,128]{1,0:T(1,128)}', space=vmem, size = 0x9000, scoped, tag = 'internal scratch']
  %s0 = inlined_call_operand.vmem [shape: f32[64,48], index: 0, kind: input, shape index: {}]
  %s1 = inlined_call_operand.vmem [shape: f32[96,32], index: 1, kind: input, shape index: {}]
  %s2 = inlined_call_operand.vmem [shape: f32[64,16], index: 2, kind: output, shape index: {}]
  %s3 = sld [smem:[#allocation0]]
  $region41: #{decoder_new.1} parent=0
    _
  %s5 = ssub.s32 1, %s3
  %s6 = scalar_select 0, %s5, %s3
  loop: start=0, step=1, limit=6
  $region2: #{decoder_new.1} parent=0 // loop_pre_header
    _
  $region3: #{decoder_new.1} parent=0 // loop_header
    %s8 = sphi 0, %s12
    %p9 = scmp.ge.s32.totalorder %s8, 6
    %s18 = sphi 0, %s20
    %s21 = sphi 0, %s18
    %s22 = sphi 0, %s21
    %s38 = sphi 0, %s22
    %s42 = sphi 0, %s42
    %s44 = sphi 0, %s42
    %s45 = sphi 0, %s44
    %s59 = sphi 0, %s45
    %s65 = sphi 0, %s67
    %s68 = sphi 0, %s65
    %s69 = sphi 0, %s68
    %s85 = sphi 0, %s69
  $region4: #{decoder_new.1} parent=0 // loop_header_branch
    %11 = sbr.rel (%p9) target = $region8
  $region5: #{decoder_new.1} parent=0 // loop_body
    %s13 = ssub.s32 %s8, 1
    %s14 = ssub.s32 %s8, 2
    %s15 = sadd.s32 %s8, 1
    %s16 = ssub.s32 %s8, %s15
    %p17 = scmp.eq.s32.totalorder %s16, 0
    %s19 = sadd.s32 %s18, 1
    %s20 = scalar_select %p17, %s18, %s19
    %p23 = pneg %p17
    %p24 = scmp.eq.s32.totalorder %s8, 3
    %p25 = por %p23, %p24
    %p26 = scmp.ne.s32.totalorder %s18, %s21
    %p27 = scmp.eq.s32.totalorder %s8, 0
    %p28 = por %p26, %p27
    %p29 = scmp.ne.s32.totalorder %s18, %s21
    %p30 = scmp.eq.s32.totalorder %s13, 3
    %p31 = por %p29, %p30
    %p32 = scmp.ne.s32.totalorder %s21, %s22
    %p33 = scmp.eq.s32.totalorder %s13, 0
    %p34 = por %p32, %p33
    %p35 = scmp.ne.s32.totalorder %s21, %s22
    %p36 = scmp.eq.s32.totalorder %s14, 3
    %p37 = por %p35, %p36
    %p39 = scmp.ne.s32.totalorder %s22, %s38
    %p40 = scmp.eq.s32.totalorder %s14, 0
    %p41 = por %p39, %p40
    %s43 = sadd.s32 %s42, 1
    %p46 = scmp.eq.s32.totalorder %s8, 3
    %p47 = scmp.ne.s32.totalorder %s42, %s44
    %p48 = scmp.eq.s32.totalorder %s8, 0
    %p49 = por %p47, %p48
    %p50 = scmp.ne.s32.totalorder %s42, %s44
    %p51 = scmp.eq.s32.totalorder %s13, 3
    %p52 = por %p50, %p51
    %p53 = scmp.ne.s32.totalorder %s44, %s45
    %p54 = scmp.eq.s32.totalorder %s13, 0
    %p55 = por %p53, %p54
    %p56 = scmp.ne.s32.totalorder %s44, %s45
    %p57 = scmp.eq.s32.totalorder %s14, 3
    %p58 = por %p56, %p57
    %p60 = scmp.ne.s32.totalorder %s45, %s59
    %p61 = scmp.eq.s32.totalorder %s14, 0
    %p62 = por %p60, %p61
    %s63 = ssub.s32 %s8, %s15
    %p64 = scmp.eq.s32.totalorder %s63, 0
    %s66 = sadd.s32 %s65, 1
    %s67 = scalar_select %p64, %s65, %s66
    %p70 = pneg %p64
    %p71 = scmp.eq.s32.totalorder %s8, 3
    %p72 = por %p70, %p71
    %p73 = scmp.ne.s32.totalorder %s65, %s68
    %p74 = scmp.eq.s32.totalorder %s8, 0
    %p75 = por %p73, %p74
    %p76 = scmp.ne.s32.totalorder %s65, %s68
    %p77 = scmp.eq.s32.totalorder %s13, 3
    %p78 = por %p76, %p77
    %p79 = scmp.ne.s32.totalorder %s68, %s69
    %p80 = scmp.eq.s32.totalorder %s13, 0
    %p81 = por %p79, %p80
    %p82 = scmp.ne.s32.totalorder %s68, %s69
    %p83 = scmp.eq.s32.totalorder %s14, 3
    %p84 = por %p82, %p83
    %p86 = scmp.ne.s32.totalorder %s69, %s85
    %p87 = scmp.eq.s32.totalorder %s14, 0
    %p88 = por %p86, %p87
    %p89 = scmp.le.s32.totalorder 1, %s8
    %p90 = scmp.lt.s32.totalorder %s8, 5
    %p91 = pnand %p89, %p90
    %p92 = pneg %p91
    // Predicated region
    $region9: #{decoder_new.1} parent=5 // pred_check
      _
    $region10: #{decoder_new.1} parent=5 // pred_check_branch
      %94 = sbr.rel (%p91) target = $region12
    $region11: #{decoder_new.1} parent=5 // pred_region
      %s95 = ssub.s32 %s8, 1
      // Predicated region
      $region13: #{decoder_new.1} parent=11 // pred_check
        %p96 = pneg %p55
      $region14: #{decoder_new.1} parent=11 // pred_check_branch
        %98 = sbr.rel (%p96) target = $region16
      $region15: #{decoder_new.1} parent=11 // pred_region
        _
      $region16: #{decoder_new.1} parent=11 // pred_fallthru
        _
    $region12: #{decoder_new.1} parent=5 // pred_fallthru
      _
    %p99 = scmp.lt.s32.totalorder %s8, 4
    // Predicated region
    $region17: #{decoder_new.1} parent=5 // pred_check
      %p100 = pneg %p99
    $region18: #{decoder_new.1} parent=5 // pred_check_branch
      %102 = sbr.rel (%p100) target = $region20
    $region19: #{decoder_new.1} parent=5 // pred_region
      // Predicated region
      $region21: #{decoder_new.1} parent=19 // pred_check
        %p103 = pneg %p28
      $region22: #{decoder_new.1} parent=19 // pred_check_branch
        %105 = sbr.rel (%p103) target = $region24
      $region23: #{decoder_new.1} parent=19 // pred_region
        %s106 = smul.u32 2, %s8
        %p107 = scmp.lt.s32.totalorder %s106, 7
        %s108 = scalar_select %p107, %s106, 7
        %s109 = smul.addr %s108, 8
        %s110 = scalar_lea.vmem %s0, %s109
        %s111 = smul.u32 2, %s8
      $region24: #{decoder_new.1} parent=19 // pred_fallthru
        _
    $region20: #{decoder_new.1} parent=5 // pred_fallthru
      _
    %p112 = scmp.le.s32.totalorder 1, %s8
    %p113 = scmp.lt.s32.totalorder %s8, 5
    %p114 = pnand %p112, %p113
    %p115 = pneg %p114
    // Predicated region
    $region25: #{decoder_new.1} parent=5 // pred_check
      _
    $region26: #{decoder_new.1} parent=5 // pred_check_branch
      %117 = sbr.rel (%p114) target = $region28
    $region27: #{decoder_new.1} parent=5 // pred_region
      %s118 = ssub.s32 %s8, 1
      %s119 = smul.u32 2, %s13
      %p120 = scmp.lt.s32.totalorder %s119, 7
      %s121 = scalar_select %p120, %s119, 7
      %s122 = smul.addr %s121, 8
      %s123 = scalar_lea.vmem %s0, %s122
      %p124 = pneg %p34
      %p125 = pneg %p31
      %p126 = pneg %p55
      %p127 = pneg %p52
      %p128 = pneg %p81
      %p129 = pneg %p78
      %s130 = smul.u32 2, %s13
      %p131 = scmp.lt.s32.totalorder %s130, 7
      %s132 = scalar_select %p131, %s130, 7
      %s133 = smul.addr %s132, 8
      %s134 = scalar_lea.vmem %s2, %s133
      %s135 = smul.u32 2, %s13
      %p136 = scmp.lt.s32.totalorder %s135, 7
      %s137 = scalar_select %p136, %s135, 7
      %s138 = smul.addr %s137, 8
      %s139 = scalar_lea.vmem %s0, %s138
      %s140 = smul.u32 2, %s13
      %s141 = smul.u32 2, %s13
      %p142 = scmp.lt.s32.totalorder %s141, 7
      %s143 = scalar_select %p142, %s141, 7
      %s144 = smul.addr %s143, 8
      %s145 = scalar_lea.vmem %s2, %s144
      %s146 = smul.u32 2, %s13
      %v147 = vld [vmem:[%s139] sm:$0xff]
      %v148 = vld [vmem:[%s139 + $0x8] sm:$0xff]
      %v149 = vld [vmem:[%s1] sm:$0xff]
      %v150 = vld [vmem:[%s1 + $0x8] sm:$0xff]
      %v151 = vld [vmem:[%s1 + $0x10] sm:$0xff]
      %v152 = vld [vmem:[%s1 + $0x18] sm:$0xff]
      %v153 = vld [vmem:[%s1 + $0x20] sm:$0xff]
      %v154 = vld [vmem:[%s1 + $0x28] sm:$0xff]
      %v155 = vld [vmem:[%s1 + $0x30] sm:$0x1]
      %v156 = vld [vmem:[%s1 + $0x38] sm:$0xff]
      %v157 = vld [vmem:[%s1 + $0x40] sm:$0xff]
      %v158 = vld [vmem:[%s1 + $0x48] sm:$0xff]
      %v159 = vld [vmem:[%s1 + $0x50] sm:$0xff]
      %v160 = vld [vmem:[%s1 + $0x58] sm:$0x1]
      %v161 = vperm.slane %v155, 0
      %vm162 = vcmask 392192
      %v164 = vsel %vm162, %v147, 0
      %v167 = vsel %vm162, %v148, 0
      %169 = vmatpush.msra.mxu0 0.0
      %170 = vmatpush.msra.mxu0 0.0
      %171 = vmatpush.msra.mxu0 0.0
      %172 = vmatpush.msra.mxu0 0.0
      %173 = vmatpush.msra.mxu0 0.0
      %174 = vmatpush.msra.mxu0 0.0
      %175 = vmatpush.msra.mxu0 0.0
      %176 = vmatpush.msra.mxu0 0.0
      %177 = vmatpush.msra.mxu0 0.0
      %178 = vmatpush.msra.mxu0 0.0
      %179 = vmatpush.msra.mxu0 %v154
      %180 = vmatpush.msra.mxu0 %v153
      %181 = vmatpush.msra.mxu0 %v152
      %182 = vmatpush.msra.mxu0 %v151
      %183 = vmatpush.msra.mxu0 %v150
      %184 = vmatpush.msra.mxu0 %v149
      %185 = vmatmul.f32.gmra.mxu0 %v164
      %v186 = vpop.f32.mrf.mxu0
      %v187 = vadd.f32 %v161, %v186
      %188 = vmatmul.f32.gmra.mxu0 %v167
      %v189 = vpop.f32.mrf.mxu0
      %v190 = vadd.f32 %v161, %v189
      %191 = vdwg.mxu0
      %v192 = vtanh.pop %v187
      %v193 = vtanh.pop %v190
      %v194 = vperm.slane %v160, 0
      %vm195 = vcmask 261120
      %v197 = vsel %vm195, %v192, 0
      %v200 = vsel %vm195, %v193, 0
      %202 = vmatpush.msra.mxu0 0.0
      %203 = vmatpush.msra.mxu0 0.0
      %204 = vmatpush.msra.mxu0 0.0
      %205 = vmatpush.msra.mxu0 0.0
      %206 = vmatpush.msra.mxu0 0.0
      %207 = vmatpush.msra.mxu0 0.0
      %208 = vmatpush.msra.mxu0 0.0
      %209 = vmatpush.msra.mxu0 0.0
      %210 = vmatpush.msra.mxu0 0.0
      %211 = vmatpush.msra.mxu0 0.0
      %212 = vmatpush.msra.mxu0 0.0
      %213 = vmatpush.msra.mxu0 0.0
      %214 = vmatpush.msra.mxu0 %v159
      %215 = vmatpush.msra.mxu0 %v158
      %216 = vmatpush.msra.mxu0 %v157
      %217 = vmatpush.msra.mxu0 %v156
      %218 = vmatmul.f32.gmra.mxu0 %v197
      %v219 = vpop.f32.mrf.mxu0
      %v220 = vadd.f32 %v194, %v219
      %221 = vmatmul.f32.gmra.mxu0 %v200
      %v222 = vpop.f32.mrf.mxu0
      %v223 = vadd.f32 %v194, %v222
      %224 = vdwg.mxu0
      %v225 = vxor.u32 %v220, 2147483648
      %v226 = vxor.u32 %v223, 2147483648
      %v227 = vmul.f32 %v225, 1.442695
      %v228 = vpow.pop %v227
      %v229 = vmul.f32 %v226, 1.442695
      %v230 = vpow.pop %v229
      %v231 = vadd.f32 %v228, 1.0
      %v232 = vadd.f32 %v230, 1.0
      %v233 = vrcp.pop %v231
      %v234 = vmul.f32 %v231, %v233
      %v235 = vsub.f32 1.0, %v234
      %v236 = vmul.f32 %v233, %v235
      %v237 = vadd.f32 %v233, %v236
      %vm238 = vweird.f32 %v231
      %vm239 = vweird.f32 %v233
      %vm240 = vmor %vm238, %vm239
      %v241 = vsel %vm240, %v233, %v237
      %v242 = vand.u32 2147483647, %v231
      %vm243 = vcmp.eq.f32.partialorder %v242, 8.507059e+37
      %v244 = vand.u32 %v231, 2147483648
      %v245 = vor.u32 1.1754944e-38, %v244
      %v246 = vsel %vm243, %v245, %v241
      %v247 = vmul.f32 1.0, %v246
      %v248 = vrcp.pop %v232
      %v249 = vmul.f32 %v232, %v248
      %v250 = vsub.f32 1.0, %v249
      %v251 = vmul.f32 %v248, %v250
      %v252 = vadd.f32 %v248, %v251
      %vm253 = vweird.f32 %v232
      %vm254 = vweird.f32 %v248
      %vm255 = vmor %vm253, %vm254
      %v256 = vsel %vm255, %v248, %v252
      %v257 = vand.u32 2147483647, %v232
      %vm258 = vcmp.eq.f32.partialorder %v257, 8.507059e+37
      %v259 = vand.u32 %v232, 2147483648
      %v260 = vor.u32 1.1754944e-38, %v259
      %v261 = vsel %vm258, %v260, %v256
      %v262 = vmul.f32 1.0, %v261
      %vm263 = vcmask 130048
      %264 = vst.msk [vmem:[%s145] sm:$0xff] %vm263, %v247
      %265 = vst.msk [vmem:[%s145 + $0x8] sm:$0xff] %vm263, %v262
      %s266 = smul.u32 2, %s13
      %p267 = scmp.lt.s32.totalorder %s266, 7
      %s268 = scalar_select %p267, %s266, 7
      %s269 = smul.addr %s268, 8
      %s270 = scalar_lea.vmem %s2, %s269
      // Predicated region
      $region29: #{decoder_new.1} parent=27 // pred_check
        %p271 = pneg %p78
      $region30: #{decoder_new.1} parent=27 // pred_check_branch
        %273 = sbr.rel (%p271) target = $region32
      $region31: #{decoder_new.1} parent=27 // pred_region
        %s274 = smul.u32 2, %s13
      $region32: #{decoder_new.1} parent=27 // pred_fallthru
        _
    $region28: #{decoder_new.1} parent=5 // pred_fallthru
      _
    %p275 = scmp.le.s32.totalorder 2, %s8
    // Predicated region
    $region33: #{decoder_new.1} parent=5 // pred_check
      %p276 = pneg %p275
    $region34: #{decoder_new.1} parent=5 // pred_check_branch
      %278 = sbr.rel (%p276) target = $region36
    $region35: #{decoder_new.1} parent=5 // pred_region
      %s279 = ssub.s32 %s8, 2
      // Predicated region
      $region37: #{decoder_new.1} parent=35 // pred_check
        %p280 = pneg %p84
      $region38: #{decoder_new.1} parent=35 // pred_check_branch
        %282 = sbr.rel (%p280) target = $region40
      $region39: #{decoder_new.1} parent=35 // pred_region
        %s283 = smul.u32 2, %s14
        %p284 = scmp.lt.s32.totalorder %s283, 7
        %s285 = scalar_select %p284, %s283, 7
        %s286 = smul.addr %s285, 8
        %s287 = scalar_lea.vmem %s2, %s286
      $region40: #{decoder_new.1} parent=35 // pred_fallthru
        _
    $region36: #{decoder_new.1} parent=5 // pred_fallthru
      _
  $region6: #{decoder_new.1} parent=0 // loop_footer
    %s12 = sadd.s32 1, %s8
  $region7: #{decoder_new.1} parent=0 // loop_footer_branch
    %7 = sbr.rel target = $region3
  $region8: #{decoder_new.1} parent=0 // loop_exit
    _

</llo_original>
